<compile_context>
chip_gen: v6e
topology: v6e:2x2x1
jax: 0.10.0
libtpu: 0.0.40
codegen_flags: <defaults>
</compile_context>

<pallas_src>
import functools

import jax
import jax.numpy as jnp
from jax.experimental import pallas as pl
from jax.experimental.pallas import tpu as pltpu


def _round_up(x, m):
    return ((x + m - 1) // m) * m


def _erf(x):
    # Abramowitz & Stegun 7.1.26 rational approximation, |err| <= 1.5e-7
    # (numerically exact at f32/bf16 tolerances). Built only from ops with
    # guaranteed Mosaic lowerings (exp, mul, add, div, where).
    a1, a2, a3, a4, a5 = (0.254829592, -0.284496736, 1.421413741,
                          -1.453152027, 1.061405429)
    p = 0.3275911
    ax = jnp.abs(x)
    t = 1.0 / (1.0 + p * ax)
    poly = ((((a5 * t + a4) * t + a3) * t + a2) * t + a1) * t
    y = 1.0 - poly * jnp.exp(-ax * ax)
    return jnp.where(x >= 0.0, y, -y)


def _gelu(x, approximate):
    if approximate:
        # tanh formulation -> EUP slot (VALU relief). Matches
        # torch.nn.GELU(approximate='tanh') numerics.
        c = 0.7978845608028654  # sqrt(2/pi)
        return 0.5 * x * (1.0 + jnp.tanh(c * (x + 0.044715 * x * x * x)))
    # PyTorch nn.GELU() default = exact erf formulation.
    return 0.5 * x * (1.0 + _erf(x * 0.7071067811865476))


def pointnet_kernel(x_ref, w1_ref, b1_ref, w2_ref, b2_ref, w3_ref, b3_ref,
                    o_ref, *, n_segments, seg_rows, approximate_gelu):
    pt = pl.program_id(1)

    # o_ref stays resident across the "arbitrary" point-tile axis and holds the
    # running max; initialize it on the first point tile.
    @pl.when(pt == 0)
    def _init():
        o_ref[...] = jnp.full(o_ref.shape, -jnp.inf, o_ref.dtype)

    x = x_ref[...]                                        # (rows, C), f32 stream

    # --- layer 1: K = point_channels (tiny) -> f32 MXU pass -------------------
    h = jnp.dot(x, w1_ref[...], preferred_element_type=jnp.float32)
    h = _gelu(h + b1_ref[...], approximate_gelu)

    # --- layer 2 (MXU: bf16 inputs, f32 accumulate) ---------------------------
    h = jnp.dot(h.astype(jnp.bfloat16), w2_ref[...],
                preferred_element_type=jnp.float32)
    h = _gelu(h + b2_ref[...], approximate_gelu)

    # --- layer 3 (MXU) ---------------------------------------------------------
    y = jnp.dot(h.astype(jnp.bfloat16), w3_ref[...],
                preferred_element_type=jnp.float32)
    y = y + b3_ref[...]                                   # (rows, D_pad), f32

    # --- per-segment max over the point axis, folded into the running max -----
    # (padded point rows were edge-replicated in the wrapper, so they can never
    #  change a segment's max; no mask needed here.)
    for s in range(n_segments):
        seg = y[s * seg_rows:(s + 1) * seg_rows, :]
        seg_max = jnp.max(seg, axis=0, keepdims=True)     # (1, D_pad)
        o_ref[s] = jnp.maximum(o_ref[s], seg_max)


def pointnet_core_forward(x, params, *, approximate_gelu=True):
    """x: (B, N, C) float32 -> (B, D) float32."""
    w1, b1, w2, b2, w3, b3 = params
    B, N, C = x.shape
    H = w1.shape[1]
    D = w3.shape[1]

    # Lane-dense output: pad output channels up to a multiple of 128.
    D_pad = _round_up(D, 128)
    if D_pad != D:
        w3 = jnp.pad(w3, ((0, 0), (0, D_pad - D)))
        b3 = jnp.pad(b3, ((0, 0), (0, D_pad - D)))

    # Generation-aware budgets (v7x has 64 MiB physical VMEM vs 128 on v5e/v6e).
    try:
        vmem_bytes = pltpu.get_tpu_info().vmem_capacity_bytes
    except Exception:
        vmem_bytes = 64 * 1024 * 1024
    big_vmem = vmem_bytes >= 100 * 1024 * 1024
    target_rows = 1024 if big_vmem else 512
    vmem_limit = (96 if big_vmem else 48) * 1024 * 1024

    # Tiling: pick (BB, TN, NT) so each grid step processes BB*TN point rows.
    n_pad8 = _round_up(N, 8)
    if n_pad8 <= target_rows:
        # Small-N regime: pack several batch items per grid step so the MXU
        # M dim fills and per-step overhead is amortized.
        TN = n_pad8
        BB = max(1, min(B, target_rows // TN, 32))
        NT = 1
    else:
        # Large-N regime: stream big point tiles (multiple of 256) and reduce
        # with a running max held in the resident output block.
        TN = min(target_rows, _round_up(N, 256))
        BB = 1
        NT = pl.cdiv(N, TN)
    N_pad = NT * TN
    B_pad = _round_up(B, BB)

    if (N_pad != N) or (B_pad != B):
        # 'edge' padding replicates a real point of the same item, so padded
        # rows can never win the per-item max -> no in-kernel mask required.
        x = jnp.pad(x, ((0, B_pad - B), (0, N_pad - N), (0, 0)), mode="edge")
    x2 = x.reshape(B_pad * N_pad, C)   # metadata-only reshape; f32 stream

    # Only the MXU matmul weights go to bf16; x / biases / w1 stay f32.
    w2_bf = w2.astype(jnp.bfloat16)
    w3_bf = w3.astype(jnp.bfloat16)

    kernel = functools.partial(pointnet_kernel, n_segments=BB, seg_rows=TN,
                               approximate_gelu=approximate_gelu)

    def const_spec(shape):
        # Grid-invariant operand: single-buffer it (no DMA to hide; halves its
        # VMEM footprint — matters under v7x's 64 MiB VMEM).
        return pl.BlockSpec(shape, lambda bi, pt: (0,) * len(shape),
                            pipeline_mode=pl.Buffered(1))

    out = pl.pallas_call(
        kernel,
        out_shape=jax.ShapeDtypeStruct((B_pad, 1, D_pad), jnp.float32),
        grid_spec=pltpu.PrefetchScalarGridSpec(
            num_scalar_prefetch=0,
            grid=(B_pad // BB, NT),
            in_specs=[
                # x rows for (batch-group bi, point tile pt):
                pl.BlockSpec((BB * TN, C), lambda bi, pt: (bi * NT + pt, 0)),
                const_spec((C, H)), const_spec((1, H)),
                const_spec((H, H)), const_spec((1, H)),
                const_spec((H, D_pad)), const_spec((1, D_pad)),
            ],
            out_specs=pl.BlockSpec((BB, 1, D_pad), lambda bi, pt: (bi, 0, 0)),
        ),
        compiler_params=pltpu.CompilerParams(
            dimension_semantics=("parallel", "arbitrary"),
            vmem_limit_bytes=vmem_limit,
        ),
    )(x2, w1, b1, w2_bf, b2, w3_bf, b3)
    return out[:B, 0, :D]


def init_params(key, point_channels, hidden_dim, output_dim):
    # Deterministic synthetic init (hidden_depth = 2 -> 3 linear layers).
    k1, k2, k3, k4, k5, k6 = jax.random.split(key, 6)
    scale = 0.1
    w1 = scale * jax.random.normal(k1, (point_channels, hidden_dim), jnp.float32)
    b1 = scale * jax.random.normal(k2, (1, hidden_dim), jnp.float32)
    w2 = scale * jax.random.normal(k3, (hidden_dim, hidden_dim), jnp.float32)
    b2 = scale * jax.random.normal(k4, (1, hidden_dim), jnp.float32)
    w3 = scale * jax.random.normal(k5, (hidden_dim, output_dim), jnp.float32)
    b3 = scale * jax.random.normal(k6, (1, output_dim), jnp.float32)
    return (w1, b1, w2, b2, w3, b3)


def reference_forward(x, params, *, approximate_gelu):
    # Pure-JAX f32 reference of the PyTorch module for verification.
    w1, b1, w2, b2, w3, b3 = params
    h = _gelu(x @ w1 + b1[0], approximate_gelu)
    h = _gelu(h @ w2 + b2[0], approximate_gelu)
    y = h @ w3 + b3[0]
    return jnp.max(y, axis=-2)


if __name__ == "__main__":
    # Small shapes consistent with the module's forward:
    #   batch=2, points=16, point_channels=3, hidden_dim=32, output_dim=32
    B, N, C = 2, 16, 3
    HIDDEN, OUT = 32, 32

    key = jax.random.PRNGKey(0)
    kx, kp = jax.random.split(key)
    x = jax.random.normal(kx, (B, N, C), jnp.float32)
    params = init_params(kp, C, HIDDEN, OUT)

    # 1) Exact-erf parity path (matches PyTorch nn.GELU() default semantics).
    out_exact = jax.block_until_ready(
        pointnet_core_forward(x, params, approximate_gelu=False))
    ref_exact = reference_forward(x, params, approximate_gelu=False)
    assert out_exact.shape == (B, OUT)
    # Tolerance accounts for bf16 layer-2/3 matmul inputs (reference is pure f32).
    assert jnp.allclose(out_exact, ref_exact, atol=2e-2, rtol=2e-2), \
        "exact-GELU kernel mismatch vs reference"

    # 2) Default fast path: tanh-approximate GELU on the EUP slot.
    out_fast = jax.block_until_ready(pointnet_core_forward(x, params))
    ref_fast = reference_forward(x, params, approximate_gelu=True)
    assert out_fast.shape == (B, OUT)
    assert jnp.allclose(out_fast, ref_fast, atol=2e-2, rtol=2e-2), \
        "approx-GELU kernel mismatch vs reference"

    print("KERNEL_OK")
</pallas_src>

<mosaic_0001>
module attributes {stable_mosaic.version = 11 : i64} {
  func.func @pointnet_kernel(%arg0: i32, %arg1: i32, %arg2: memref<32x3xf32, #tpu.memory_space<vmem>>, %arg3: memref<3x32xf32, #tpu.memory_space<vmem>>, %arg4: memref<1x32xf32, #tpu.memory_space<vmem>>, %arg5: memref<32x32xbf16, #tpu.memory_space<vmem>>, %arg6: memref<1x32xf32, #tpu.memory_space<vmem>>, %arg7: memref<32x128xbf16, #tpu.memory_space<vmem>>, %arg8: memref<1x128xf32, #tpu.memory_space<vmem>>, %arg9: memref<2x1x128xf32, #tpu.memory_space<vmem>>) attributes {dimension_semantics = [#tpu.dimension_semantics<parallel>, #tpu.dimension_semantics<arbitrary>], iteration_bounds = array<i64: 1, 1>, scalar_prefetch = 0 : i64, scratch_operands = 0 : i64, tpu.core_type = #tpu.core_type<tc>, window_params = [{transform_indices = @transform_0, window_bounds = array<i64: 32, 3>}, {pipeline_mode = #tpu.pipeline_mode<synchronous>, transform_indices = @transform_1, window_bounds = array<i64: 3, 32>}, {pipeline_mode = #tpu.pipeline_mode<synchronous>, transform_indices = @transform_2, window_bounds = array<i64: 1, 32>}, {pipeline_mode = #tpu.pipeline_mode<synchronous>, transform_indices = @transform_3, window_bounds = array<i64: 32, 32>}, {pipeline_mode = #tpu.pipeline_mode<synchronous>, transform_indices = @transform_4, window_bounds = array<i64: 1, 32>}, {pipeline_mode = #tpu.pipeline_mode<synchronous>, transform_indices = @transform_5, window_bounds = array<i64: 32, 128>}, {pipeline_mode = #tpu.pipeline_mode<synchronous>, transform_indices = @transform_6, window_bounds = array<i64: 1, 128>}, {transform_indices = @transform_7, window_bounds = array<i64: 2, 1, 128>}]} {
    %c0_i32 = arith.constant 0 : i32
    %0 = arith.cmpi eq, %arg1, %c0_i32 : i32
    %1 = arith.extui %0 : i1 to i32
    %c0_i32_0 = arith.constant 0 : i32
    %2 = arith.cmpi ne, %1, %c0_i32_0 : i32
    scf.if %2 {
      %cst_59 = arith.constant 0xFF800000 : f32
      %119 = vector.broadcast %cst_59 : f32 to vector<2x1x128xf32>
      %c0_60 = arith.constant 0 : index
      %c0_61 = arith.constant 0 : index
      %c0_62 = arith.constant 0 : index
      %120 = vector.load %arg9[%c0_60, %c0_61, %c0_62] : memref<2x1x128xf32, #tpu.memory_space<vmem>>, vector<2x1x128xf32>
      tpu.vector_store %arg9[%c0_60, %c0_61, %c0_62], %119 {strides = array<i32>} : memref<2x1x128xf32, #tpu.memory_space<vmem>>, vector<2x1x128xf32>,
    } else {
    }
    %c0 = arith.constant 0 : index
    %c0_1 = arith.constant 0 : index
    %3 = vector.load %arg2[%c0, %c0_1] : memref<32x3xf32, #tpu.memory_space<vmem>>, vector<32x3xf32>
    %c0_2 = arith.constant 0 : index
    %c0_3 = arith.constant 0 : index
    %4 = vector.load %arg3[%c0_2, %c0_3] : memref<3x32xf32, #tpu.memory_space<vmem>>, vector<3x32xf32>
    %cst = arith.constant dense<0.000000e+00> : vector<32x32xf32>
    %5 = tpu.matmul %3, %4, %cst {dimension_numbers = #tpu.dot_dimension_numbers<[1], [0], [0], [1], [0, 0, 1, 1], [], []>} : vector<32x3xf32>, vector<3x32xf32>, vector<32x32xf32> -> vector<32x32xf32>
    %c0_4 = arith.constant 0 : index
    %c0_5 = arith.constant 0 : index
    %6 = vector.load %arg4[%c0_4, %c0_5] : memref<1x32xf32, #tpu.memory_space<vmem>>, vector<1x32xf32>
    %7 = vector.broadcast %6 : vector<1x32xf32> to vector<32x32xf32>
    %8 = arith.addf %5, %7 : vector<32x32xf32>
    %cst_6 = arith.constant 5.000000e-01 : f32
    %9 = vector.broadcast %cst_6 : f32 to vector<32x32xf32>
    %10 = arith.mulf %9, %8 : vector<32x32xf32>
    %cst_7 = arith.constant 0.707106769 : f32
    %11 = vector.broadcast %cst_7 : f32 to vector<32x32xf32>
    %12 = arith.mulf %8, %11 : vector<32x32xf32>
    %13 = math.absf %12 : vector<32x32xf32>
    %cst_8 = arith.constant 0.327591091 : f32
    %14 = vector.broadcast %cst_8 : f32 to vector<32x32xf32>
    %15 = arith.mulf %14, %13 : vector<32x32xf32>
    %cst_9 = arith.constant 1.000000e+00 : f32
    %16 = vector.broadcast %cst_9 : f32 to vector<32x32xf32>
    %17 = arith.addf %16, %15 : vector<32x32xf32>
    %cst_10 = arith.constant 1.000000e+00 : f32
    %18 = vector.broadcast %cst_10 : f32 to vector<32x32xf32>
    %19 = arith.divf %18, %17 : vector<32x32xf32>
    %cst_11 = arith.constant 1.06140542 : f32
    %20 = vector.broadcast %cst_11 : f32 to vector<32x32xf32>
    %21 = arith.mulf %20, %19 : vector<32x32xf32>
    %cst_12 = arith.constant -1.45315206 : f32
    %22 = vector.broadcast %cst_12 : f32 to vector<32x32xf32>
    %23 = arith.addf %21, %22 : vector<32x32xf32>
    %24 = arith.mulf %23, %19 : vector<32x32xf32>
    %cst_13 = arith.constant 1.42141378 : f32
    %25 = vector.broadcast %cst_13 : f32 to vector<32x32xf32>
    %26 = arith.addf %24, %25 : vector<32x32xf32>
    %27 = arith.mulf %26, %19 : vector<32x32xf32>
    %cst_14 = arith.constant -0.284496725 : f32
    %28 = vector.broadcast %cst_14 : f32 to vector<32x32xf32>
    %29 = arith.addf %27, %28 : vector<32x32xf32>
    %30 = arith.mulf %29, %19 : vector<32x32xf32>
    %cst_15 = arith.constant 0.254829586 : f32
    %31 = vector.broadcast %cst_15 : f32 to vector<32x32xf32>
    %32 = arith.addf %30, %31 : vector<32x32xf32>
    %33 = arith.mulf %32, %19 : vector<32x32xf32>
    %cst_16 = arith.constant 0.000000e+00 : f32
    %34 = vector.broadcast %cst_16 : f32 to vector<32x32xf32>
    %35 = arith.subf %34, %13 : vector<32x32xf32>
    %36 = arith.mulf %35, %13 : vector<32x32xf32>
    %37 = math.exp %36 : vector<32x32xf32>
    %38 = arith.mulf %33, %37 : vector<32x32xf32>
    %cst_17 = arith.constant 1.000000e+00 : f32
    %39 = vector.broadcast %cst_17 : f32 to vector<32x32xf32>
    %40 = arith.subf %39, %38 : vector<32x32xf32>
    %cst_18 = arith.constant 0.000000e+00 : f32
    %41 = vector.broadcast %cst_18 : f32 to vector<32x32xf32>
    %42 = arith.cmpf oge, %12, %41 : vector<32x32xf32>
    %cst_19 = arith.constant 0.000000e+00 : f32
    %43 = vector.broadcast %cst_19 : f32 to vector<32x32xf32>
    %44 = arith.subf %43, %40 : vector<32x32xf32>
    %45 = arith.select %42, %40, %44 : vector<32x32xi1>, vector<32x32xf32>
    %cst_20 = arith.constant 1.000000e+00 : f32
    %46 = vector.broadcast %cst_20 : f32 to vector<32x32xf32>
    %47 = arith.addf %46, %45 : vector<32x32xf32>
    %48 = arith.mulf %10, %47 : vector<32x32xf32>
    %49 = arith.truncf %48 : vector<32x32xf32> to vector<32x32xbf16>
    %c0_21 = arith.constant 0 : index
    %c0_22 = arith.constant 0 : index
    %50 = vector.load %arg5[%c0_21, %c0_22] : memref<32x32xbf16, #tpu.memory_space<vmem>>, vector<32x32xbf16>
    %cst_23 = arith.constant dense<0.000000e+00> : vector<32x32xf32>
    %51 = tpu.matmul %49, %50, %cst_23 {dimension_numbers = #tpu.dot_dimension_numbers<[1], [0], [0], [1], [0, 0, 1, 1], [], []>} : vector<32x32xbf16>, vector<32x32xbf16>, vector<32x32xf32> -> vector<32x32xf32>
    %c0_24 = arith.constant 0 : index
    %c0_25 = arith.constant 0 : index
    %52 = vector.load %arg6[%c0_24, %c0_25] : memref<1x32xf32, #tpu.memory_space<vmem>>, vector<1x32xf32>
    %53 = vector.broadcast %52 : vector<1x32xf32> to vector<32x32xf32>
    %54 = arith.addf %51, %53 : vector<32x32xf32>
    %cst_26 = arith.constant 5.000000e-01 : f32
    %55 = vector.broadcast %cst_26 : f32 to vector<32x32xf32>
    %56 = arith.mulf %55, %54 : vector<32x32xf32>
    %cst_27 = arith.constant 0.707106769 : f32
    %57 = vector.broadcast %cst_27 : f32 to vector<32x32xf32>
    %58 = arith.mulf %54, %57 : vector<32x32xf32>
    %59 = math.absf %58 : vector<32x32xf32>
    %cst_28 = arith.constant 0.327591091 : f32
    %60 = vector.broadcast %cst_28 : f32 to vector<32x32xf32>
    %61 = arith.mulf %60, %59 : vector<32x32xf32>
    %cst_29 = arith.constant 1.000000e+00 : f32
    %62 = vector.broadcast %cst_29 : f32 to vector<32x32xf32>
    %63 = arith.addf %62, %61 : vector<32x32xf32>
    %cst_30 = arith.constant 1.000000e+00 : f32
    %64 = vector.broadcast %cst_30 : f32 to vector<32x32xf32>
    %65 = arith.divf %64, %63 : vector<32x32xf32>
    %cst_31 = arith.constant 1.06140542 : f32
    %66 = vector.broadcast %cst_31 : f32 to vector<32x32xf32>
    %67 = arith.mulf %66, %65 : vector<32x32xf32>
    %cst_32 = arith.constant -1.45315206 : f32
    %68 = vector.broadcast %cst_32 : f32 to vector<32x32xf32>
    %69 = arith.addf %67, %68 : vector<32x32xf32>
    %70 = arith.mulf %69, %65 : vector<32x32xf32>
    %cst_33 = arith.constant 1.42141378 : f32
    %71 = vector.broadcast %cst_33 : f32 to vector<32x32xf32>
    %72 = arith.addf %70, %71 : vector<32x32xf32>
    %73 = arith.mulf %72, %65 : vector<32x32xf32>
    %cst_34 = arith.constant -0.284496725 : f32
    %74 = vector.broadcast %cst_34 : f32 to vector<32x32xf32>
    %75 = arith.addf %73, %74 : vector<32x32xf32>
    %76 = arith.mulf %75, %65 : vector<32x32xf32>
    %cst_35 = arith.constant 0.254829586 : f32
    %77 = vector.broadcast %cst_35 : f32 to vector<32x32xf32>
    %78 = arith.addf %76, %77 : vector<32x32xf32>
    %79 = arith.mulf %78, %65 : vector<32x32xf32>
    %cst_36 = arith.constant 0.000000e+00 : f32
    %80 = vector.broadcast %cst_36 : f32 to vector<32x32xf32>
    %81 = arith.subf %80, %59 : vector<32x32xf32>
    %82 = arith.mulf %81, %59 : vector<32x32xf32>
    %83 = math.exp %82 : vector<32x32xf32>
    %84 = arith.mulf %79, %83 : vector<32x32xf32>
    %cst_37 = arith.constant 1.000000e+00 : f32
    %85 = vector.broadcast %cst_37 : f32 to vector<32x32xf32>
    %86 = arith.subf %85, %84 : vector<32x32xf32>
    %cst_38 = arith.constant 0.000000e+00 : f32
    %87 = vector.broadcast %cst_38 : f32 to vector<32x32xf32>
    %88 = arith.cmpf oge, %58, %87 : vector<32x32xf32>
    %cst_39 = arith.constant 0.000000e+00 : f32
    %89 = vector.broadcast %cst_39 : f32 to vector<32x32xf32>
    %90 = arith.subf %89, %86 : vector<32x32xf32>
    %91 = arith.select %88, %86, %90 : vector<32x32xi1>, vector<32x32xf32>
    %cst_40 = arith.constant 1.000000e+00 : f32
    %92 = vector.broadcast %cst_40 : f32 to vector<32x32xf32>
    %93 = arith.addf %92, %91 : vector<32x32xf32>
    %94 = arith.mulf %56, %93 : vector<32x32xf32>
    %95 = arith.truncf %94 : vector<32x32xf32> to vector<32x32xbf16>
    %c0_41 = arith.constant 0 : index
    %c0_42 = arith.constant 0 : index
    %96 = vector.load %arg7[%c0_41, %c0_42] : memref<32x128xbf16, #tpu.memory_space<vmem>>, vector<32x128xbf16>
    %cst_43 = arith.constant dense<0.000000e+00> : vector<32x128xf32>
    %97 = tpu.matmul %95, %96, %cst_43 {dimension_numbers = #tpu.dot_dimension_numbers<[1], [0], [0], [1], [0, 0, 1, 1], [], []>} : vector<32x32xbf16>, vector<32x128xbf16>, vector<32x128xf32> -> vector<32x128xf32>
    %c0_44 = arith.constant 0 : index
    %c0_45 = arith.constant 0 : index
    %98 = vector.load %arg8[%c0_44, %c0_45] : memref<1x128xf32, #tpu.memory_space<vmem>>, vector<1x128xf32>
    %99 = vector.broadcast %98 : vector<1x128xf32> to vector<32x128xf32>
    %100 = arith.addf %97, %99 : vector<32x128xf32>
    %101 = vector.extract_strided_slice %100 {offsets = [0, 0], sizes = [16, 128], strides = [1, 1]} : vector<32x128xf32> to vector<16x128xf32>
    %cst_46 = arith.constant dense<0xFF800000> : vector<128xf32>
    %102 = vector.multi_reduction <maximumf>, %101, %cst_46 [0] : vector<16x128xf32> to vector<128xf32>
    %103 = vector.shape_cast %102 : vector<128xf32> to vector<1x128xf32>
    %c0_47 = arith.constant 0 : index
    %c0_48 = arith.constant 0 : index
    %c0_49 = arith.constant 0 : index
    %104 = vector.load %arg9[%c0_47, %c0_48, %c0_49] : memref<2x1x128xf32, #tpu.memory_space<vmem>>, vector<1x1x128xf32>
    %105 = vector.shape_cast %104 : vector<1x1x128xf32> to vector<1x128xf32>
    %106 = arith.maximumf %105, %103 : vector<1x128xf32>
    %c0_50 = arith.constant 0 : index
    %c0_51 = arith.constant 0 : index
    %c0_52 = arith.constant 0 : index
    %107 = vector.load %arg9[%c0_50, %c0_51, %c0_52] : memref<2x1x128xf32, #tpu.memory_space<vmem>>, vector<1x1x128xf32>
    %108 = vector.shape_cast %107 : vector<1x1x128xf32> to vector<1x128xf32>
    %109 = vector.shape_cast %106 : vector<1x128xf32> to vector<1x1x128xf32>
    tpu.vector_store %arg9[%c0_50, %c0_51, %c0_52], %109 {strides = array<i32>} : memref<2x1x128xf32, #tpu.memory_space<vmem>>, vector<1x1x128xf32>,
    %110 = vector.extract_strided_slice %100 {offsets = [16, 0], sizes = [16, 128], strides = [1, 1]} : vector<32x128xf32> to vector<16x128xf32>
    %cst_53 = arith.constant dense<0xFF800000> : vector<128xf32>
    %111 = vector.multi_reduction <maximumf>, %110, %cst_53 [0] : vector<16x128xf32> to vector<128xf32>
    %112 = vector.shape_cast %111 : vector<128xf32> to vector<1x128xf32>
    %c1 = arith.constant 1 : index
    %c0_54 = arith.constant 0 : index
    %c0_55 = arith.constant 0 : index
    %113 = vector.load %arg9[%c1, %c0_54, %c0_55] : memref<2x1x128xf32, #tpu.memory_space<vmem>>, vector<1x1x128xf32>
    %114 = vector.shape_cast %113 : vector<1x1x128xf32> to vector<1x128xf32>
    %115 = arith.maximumf %114, %112 : vector<1x128xf32>
    %c1_56 = arith.constant 1 : index
    %c0_57 = arith.constant 0 : index
    %c0_58 = arith.constant 0 : index
    %116 = vector.load %arg9[%c1_56, %c0_57, %c0_58] : memref<2x1x128xf32, #tpu.memory_space<vmem>>, vector<1x1x128xf32>
    %117 = vector.shape_cast %116 : vector<1x1x128xf32> to vector<1x128xf32>
    %118 = vector.shape_cast %115 : vector<1x128xf32> to vector<1x1x128xf32>
    tpu.vector_store %arg9[%c1_56, %c0_57, %c0_58], %118 {strides = array<i32>} : memref<2x1x128xf32, #tpu.memory_space<vmem>>, vector<1x1x128xf32>,
    return
  }
  func.func @transform_0(%arg0: i32, %arg1: i32) -> (i32, i32) {
    %c1_i32 = arith.constant 1 : i32
    %0 = arith.muli %arg0, %c1_i32 : i32
    %1 = arith.addi %0, %arg1 : i32
    %c0_i32 = arith.constant 0 : i32
    %c0_i32_0 = arith.constant 0 : i32
    return %1, %c0_i32 : i32, i32
  }
  func.func @transform_1(%arg0: i32, %arg1: i32) -> (i32, i32) {
    %c0_i32 = arith.constant 0 : i32
    %c0_i32_0 = arith.constant 0 : i32
    %c0_i32_1 = arith.constant 0 : i32
    return %c0_i32, %c0_i32_0 : i32, i32
  }
  func.func @transform_2(%arg0: i32, %arg1: i32) -> (i32, i32) {
    %c0_i32 = arith.constant 0 : i32
    %c0_i32_0 = arith.constant 0 : i32
    %c0_i32_1 = arith.constant 0 : i32
    return %c0_i32, %c0_i32_0 : i32, i32
  }
  func.func @transform_3(%arg0: i32, %arg1: i32) -> (i32, i32) {
    %c0_i32 = arith.constant 0 : i32
    %c0_i32_0 = arith.constant 0 : i32
    %c0_i32_1 = arith.constant 0 : i32
    return %c0_i32, %c0_i32_0 : i32, i32
  }
  func.func @transform_4(%arg0: i32, %arg1: i32) -> (i32, i32) {
    %c0_i32 = arith.constant 0 : i32
    %c0_i32_0 = arith.constant 0 : i32
    %c0_i32_1 = arith.constant 0 : i32
    return %c0_i32, %c0_i32_0 : i32, i32
  }
  func.func @transform_5(%arg0: i32, %arg1: i32) -> (i32, i32) {
    %c0_i32 = arith.constant 0 : i32
    %c0_i32_0 = arith.constant 0 : i32
    %c0_i32_1 = arith.constant 0 : i32
    return %c0_i32, %c0_i32_0 : i32, i32
  }
  func.func @transform_6(%arg0: i32, %arg1: i32) -> (i32, i32) {
    %c0_i32 = arith.constant 0 : i32
    %c0_i32_0 = arith.constant 0 : i32
    %c0_i32_1 = arith.constant 0 : i32
    return %c0_i32, %c0_i32_0 : i32, i32
  }
  func.func @transform_7(%arg0: i32, %arg1: i32) -> (i32, i32, i32) {
    %c0_i32 = arith.constant 0 : i32
    %c0_i32_0 = arith.constant 0 : i32
    %c0_i32_1 = arith.constant 0 : i32
    return %arg0, %c0_i32, %c0_i32_0 : i32, i32, i32
  }
}

</mosaic_0001>

<llo_original>
// kernel: tpu_custom_call.1
$region0: #{tpu_custom_call.1}
  #allocation0 [shape = 'u32[]', space=smem, size = 0x4, offset = 0x4, fixed_abs, tag = 'smem constant byte address 0x4 - core index']
  #allocation1 [shape = 'u32[144,128]{1,0:T(1,128)}', space=vmem, size = 0x12000, scoped, tag = 'internal scratch']
  %s0 = inlined_call_operand.vmem [shape: f32[32,3], index: 0, kind: input, shape index: {}]
  %s1 = inlined_call_operand.vmem [shape: f32[3,32], index: 1, kind: input, shape index: {}]
  %s2 = inlined_call_operand.vmem [shape: f32[1,32], index: 2, kind: input, shape index: {}]
  %s3 = inlined_call_operand.vmem [shape: bf16[32,32], index: 3, kind: input, shape index: {}]
  %s4 = inlined_call_operand.vmem [shape: f32[1,32], index: 4, kind: input, shape index: {}]
  %s5 = inlined_call_operand.vmem [shape: bf16[32,128], index: 5, kind: input, shape index: {}]
  %s6 = inlined_call_operand.vmem [shape: f32[1,128], index: 6, kind: input, shape index: {}]
  %s7 = inlined_call_operand.hbm [shape: f32[2,1,128], index: 7, kind: output, shape index: {}]
  %s8 = sld [smem:[#allocation0]]
  $region42: #{tpu_custom_call.1} parent=0
    _
  %s10 = ssub.s32 1, %s8
  %s11 = scalar_select 0, %s10, %s8
  $region1: #{tpu_custom_call.1} parent=0
    #allocation2 [shape = 'u8[1024]{0}', space=vmem, size = 0x400, scoped, tag = 'output window, operand 0, single buffered']
    #allocation3 [shape = 's32[1]{0}', space=sflag, size = 0x4, scoped, tag = 'scoped memory for tpu_custom_call.1']
    %12 = vsyncpa [#allocation3], 0
    // Predicated region
    $region2: #{tpu_custom_call.1} parent=1 // pred_check
      _
    $region3: #{tpu_custom_call.1} parent=1 // pred_check_branch
      %14 = sbr.rel (0) target = $region5
    $region4: #{tpu_custom_call.1} parent=1 // pred_region
      %s15 = sadd.s32 0, 0
      %s16 = smul.u32 4, %s15
      %p17 = scmp.lt.s32.totalorder %s16, 3
      %s18 = scalar_select %p17, %s16, 3
      %s19 = smul.addr %s18, 8
      %s20 = scalar_lea.vmem %s0, %s19
      %s21 = sadd.s32 0, 0
      %s22 = smul.u32 4, %s21
    $region5: #{tpu_custom_call.1} parent=1 // pred_fallthru
      _
    // Predicated region
    $region6: #{tpu_custom_call.1} parent=1 // pred_check
      _
    $region7: #{tpu_custom_call.1} parent=1 // pred_check_branch
      %24 = sbr.rel (0) target = $region9
    $region8: #{tpu_custom_call.1} parent=1 // pred_region
      _
    $region9: #{tpu_custom_call.1} parent=1 // pred_fallthru
      _
    // Predicated region
    $region10: #{tpu_custom_call.1} parent=1 // pred_check
      _
    $region11: #{tpu_custom_call.1} parent=1 // pred_check_branch
      %26 = sbr.rel (0) target = $region13
    $region12: #{tpu_custom_call.1} parent=1 // pred_region
      _
    $region13: #{tpu_custom_call.1} parent=1 // pred_fallthru
      _
    // Predicated region
    $region14: #{tpu_custom_call.1} parent=1 // pred_check
      _
    $region15: #{tpu_custom_call.1} parent=1 // pred_check_branch
      %28 = sbr.rel (0) target = $region17
    $region16: #{tpu_custom_call.1} parent=1 // pred_region
      _
    $region17: #{tpu_custom_call.1} parent=1 // pred_fallthru
      _
    // Predicated region
    $region18: #{tpu_custom_call.1} parent=1 // pred_check
      _
    $region19: #{tpu_custom_call.1} parent=1 // pred_check_branch
      %30 = sbr.rel (0) target = $region21
    $region20: #{tpu_custom_call.1} parent=1 // pred_region
      _
    $region21: #{tpu_custom_call.1} parent=1 // pred_fallthru
      _
    // Predicated region
    $region22: #{tpu_custom_call.1} parent=1 // pred_check
      _
    $region23: #{tpu_custom_call.1} parent=1 // pred_check_branch
      %32 = sbr.rel (0) target = $region25
    $region24: #{tpu_custom_call.1} parent=1 // pred_region
      _
    $region25: #{tpu_custom_call.1} parent=1 // pred_fallthru
      _
    // Predicated region
    $region26: #{tpu_custom_call.1} parent=1 // pred_check
      _
    $region27: #{tpu_custom_call.1} parent=1 // pred_check_branch
      %34 = sbr.rel (0) target = $region29
    $region28: #{tpu_custom_call.1} parent=1 // pred_region
      _
    $region29: #{tpu_custom_call.1} parent=1 // pred_fallthru
      _
    %s35 = sadd.s32 0, 0
    %s36 = smul.u32 4, %s35
    %p37 = scmp.lt.s32.totalorder %s36, 3
    %s38 = scalar_select %p37, %s36, 3
    %s39 = smul.addr %s38, 8
    %s40 = scalar_lea.vmem %s0, %s39
    %s41 = sadd.s32 0, 0
    %s42 = smul.u32 4, %s41
    %p43 = scmp.lt.s32.totalorder %s42, 3
    %s44 = scalar_select %p43, %s42, 3
    %s45 = smul.addr %s44, 8
    %s46 = scalar_lea.vmem %s0, %s45
    %s47 = sadd.s32 0, 0
    %s48 = smul.u32 4, %s47
    %p50 = scmp.eq.s32.totalorder 0, 0
    // Predicated region
    $region30: #{tpu_custom_call.1} parent=1 // pred_check
      %p51 = pneg %p50
    $region31: #{tpu_custom_call.1} parent=1 // pred_check_branch
      %53 = sbr.rel (%p51) target = $region33
    $region32: #{tpu_custom_call.1} parent=1 // pred_region
      %54 = vst [vmem:[#allocation2] sm:$0x1] -inf
      %55 = vst [vmem:[#allocation2 + $0x1] sm:$0x1] -inf
    $region33: #{tpu_custom_call.1} parent=1 // pred_fallthru
      _
    %v56 = vld [vmem:[%s46] sm:$0xff]
    %v57 = vld [vmem:[%s46 + $0x8] sm:$0xff]
    %v58 = vld [vmem:[%s46 + $0x10] sm:$0xff]
    %v59 = vld [vmem:[%s46 + $0x18] sm:$0xff]
    %v60 = vld [vmem:[%s1] sm:$0x7]
    %v61 = vld [vmem:[%s2] sm:$0x1]
    %v63 = vlaneseq
    %v64 = vshrl.u32 %v63, 7
    %v65 = vsub.s32 0, %v64
    %v66 = vrot.slane %v61, %v65
    %vm68 = vcmask 23552
    %v70 = vsel %vm68, %v56, 0
    %v73 = vsel %vm68, %v57, 0
    %v76 = vsel %vm68, %v58, 0
    %v79 = vsel %vm68, %v59, 0
    %vm81 = vcmask 1042432
    %v83 = vsel %vm81, %v60, 0
    %85 = vmatprep.subr.mxu0 0.0
    %86 = vmatpush1.msra.mxu0 0.0
    %87 = vmatprep.subr.mxu0 0.0
    %88 = vmatpush1.msra.mxu0 0.0
    %89 = vmatprep.subr.mxu0 0.0
    %90 = vmatpush1.msra.mxu0 0.0
    %91 = vmatprep.subr.mxu0 0.0
    %92 = vmatpush1.msra.mxu0 0.0
    %93 = vmatprep.subr.mxu0 0.0
    %94 = vmatpush1.msra.mxu0 0.0
    %95 = vmatprep.subr.mxu0 0.0
    %96 = vmatpush1.msra.mxu0 0.0
    %97 = vmatprep.subr.mxu0 0.0
    %98 = vmatpush1.msra.mxu0 0.0
    %99 = vmatprep.subr.mxu0 0.0
    %100 = vmatpush1.msra.mxu0 0.0
    %101 = vmatprep.subr.mxu0 0.0
    %102 = vmatpush1.msra.mxu0 0.0
    %103 = vmatprep.subr.mxu0 0.0
    %104 = vmatpush1.msra.mxu0 0.0
    %105 = vmatprep.subr.mxu0 0.0
    %106 = vmatpush1.msra.mxu0 0.0
    %107 = vmatprep.subr.mxu0 0.0
    %108 = vmatpush1.msra.mxu0 0.0
    %109 = vmatprep.subr.mxu0 0.0
    %110 = vmatpush1.msra.mxu0 0.0
    %111 = vmatprep.subr.mxu0 0.0
    %112 = vmatpush1.msra.mxu0 0.0
    %113 = vmatprep.subr.mxu0 0.0
    %114 = vmatpush1.msra.mxu0 0.0
    %115 = vmatprep.subr.mxu0 0.0
    %116 = vmatpush1.msra.mxu0 %v83
    %117 = vmatprep.subr.mxu0 0.0
    %118 = vmatpush2.msra.mxu0 0.0
    %119 = vmatprep.subr.mxu0 0.0
    %120 = vmatpush2.msra.mxu0 0.0
    %121 = vmatprep.subr.mxu0 0.0
    %122 = vmatpush2.msra.mxu0 0.0
    %123 = vmatprep.subr.mxu0 0.0
    %124 = vmatpush2.msra.mxu0 0.0
    %125 = vmatprep.subr.mxu0 0.0
    %126 = vmatpush2.msra.mxu0 0.0
    %127 = vmatprep.subr.mxu0 0.0
    %128 = vmatpush2.msra.mxu0 0.0
    %129 = vmatprep.subr.mxu0 0.0
    %130 = vmatpush2.msra.mxu0 0.0
    %131 = vmatprep.subr.mxu0 0.0
    %132 = vmatpush2.msra.mxu0 0.0
    %133 = vmatprep.subr.mxu0 0.0
    %134 = vmatpush2.msra.mxu0 0.0
    %135 = vmatprep.subr.mxu0 0.0
    %136 = vmatpush2.msra.mxu0 0.0
    %137 = vmatprep.subr.mxu0 0.0
    %138 = vmatpush2.msra.mxu0 0.0
    %139 = vmatprep.subr.mxu0 0.0
    %140 = vmatpush2.msra.mxu0 0.0
    %141 = vmatprep.subr.mxu0 0.0
    %142 = vmatpush2.msra.mxu0 0.0
    %143 = vmatprep.subr.mxu0 0.0
    %144 = vmatpush2.msra.mxu0 0.0
    %145 = vmatprep.subr.mxu0 0.0
    %146 = vmatpush2.msra.mxu0 0.0
    %147 = vmatprep.subr.mxu0 0.0
    %148 = vmatpush2.msra.mxu0 0.0
    %149 = vmatprep.mubr.f32.mxu0 0.0
    %150 = vmatmul.mubr.f32.gmra.mxu0 %v70
    %v151 = vpop.f32.mrf.mxu0
    %v152 = vadd.f32 %v66, %v151
    %v153 = vpop.f32.mrf.mxu0
    %154 = vmatprep.mubr.f32.mxu0 0.0
    %155 = vmatmul.mubr.f32.gmra.mxu0 %v73
    %v156 = vpop.f32.mrf.mxu0
    %v157 = vadd.f32 %v66, %v156
    %v158 = vpop.f32.mrf.mxu0
    %159 = vmatprep.mubr.f32.mxu0 0.0
    %160 = vmatmul.mubr.f32.gmra.mxu0 %v76
    %v161 = vpop.f32.mrf.mxu0
    %v162 = vadd.f32 %v66, %v161
    %v163 = vpop.f32.mrf.mxu0
    %164 = vmatprep.mubr.f32.mxu0 0.0
    %165 = vmatmul.mubr.f32.gmra.mxu0 %v79
    %v166 = vpop.f32.mrf.mxu0
    %v167 = vadd.f32 %v66, %v166
    %v168 = vpop.f32.mrf.mxu0
    %169 = vdwg.mxu0
    %v170 = vmul.f32 %v152, 0.5
    %v171 = vmul.f32 %v157, 0.5
    %v172 = vmul.f32 %v162, 0.5
    %v173 = vmul.f32 %v167, 0.5
    %v174 = vmul.f32 %v152, 0.70710677
    %v175 = vmul.f32 %v157, 0.70710677
    %v176 = vmul.f32 %v162, 0.70710677
    %v177 = vmul.f32 %v167, 0.70710677
    %v178 = vand.u32 2147483647, %v174
    %v179 = vand.u32 2147483647, %v175
    %v180 = vand.u32 2147483647, %v176
    %v181 = vand.u32 2147483647, %v177
    %v182 = vmul.f32 %v178, 0.3275911
    %v183 = vmul.f32 %v179, 0.3275911
    %v184 = vmul.f32 %v180, 0.3275911
    %v185 = vmul.f32 %v181, 0.3275911
    %v186 = vadd.f32 %v182, 1.0
    %v187 = vadd.f32 %v183, 1.0
    %v188 = vadd.f32 %v184, 1.0
    %v189 = vadd.f32 %v185, 1.0
    %v190 = vrcp.pop %v186
    %v191 = vmul.f32 1.0, %v190
    %v192 = vrcp.pop %v187
    %v193 = vmul.f32 1.0, %v192
    %v194 = vrcp.pop %v188
    %v195 = vmul.f32 1.0, %v194
    %v196 = vrcp.pop %v189
    %v197 = vmul.f32 1.0, %v196
    %v198 = vmul.f32 %v191, 1.0614054
    %v199 = vmul.f32 %v193, 1.0614054
    %v200 = vmul.f32 %v195, 1.0614054
    %v201 = vmul.f32 %v197, 1.0614054
    %v202 = vadd.f32 %v198, -1.4531521
    %v203 = vadd.f32 %v199, -1.4531521
    %v204 = vadd.f32 %v200, -1.4531521
    %v205 = vadd.f32 %v201, -1.4531521
    %v206 = vmul.f32 %v202, %v191
    %v207 = vmul.f32 %v203, %v193
    %v208 = vmul.f32 %v204, %v195
    %v209 = vmul.f32 %v205, %v197
    %v210 = vadd.f32 %v206, 1.4214138
    %v211 = vadd.f32 %v207, 1.4214138
    %v212 = vadd.f32 %v208, 1.4214138
    %v213 = vadd.f32 %v209, 1.4214138
    %v214 = vmul.f32 %v210, %v191
    %v215 = vmul.f32 %v211, %v193
    %v216 = vmul.f32 %v212, %v195
    %v217 = vmul.f32 %v213, %v197
    %v218 = vadd.f32 %v214, -0.28449672
    %v219 = vadd.f32 %v215, -0.28449672
    %v220 = vadd.f32 %v216, -0.28449672
    %v221 = vadd.f32 %v217, -0.28449672
    %v222 = vmul.f32 %v218, %v191
    %v223 = vmul.f32 %v219, %v193
    %v224 = vmul.f32 %v220, %v195
    %v225 = vmul.f32 %v221, %v197
    %v226 = vadd.f32 %v222, 0.2548296
    %v227 = vadd.f32 %v223, 0.2548296
    %v228 = vadd.f32 %v224, 0.2548296
    %v229 = vadd.f32 %v225, 0.2548296
    %v230 = vmul.f32 %v226, %v191
    %v231 = vmul.f32 %v227, %v193
    %v232 = vmul.f32 %v228, %v195
    %v233 = vmul.f32 %v229, %v197
    %v234 = vsub.f32 0.0, %v178
    %v235 = vsub.f32 0.0, %v179
    %v236 = vsub.f32 0.0, %v180
    %v237 = vsub.f32 0.0, %v181
    %v238 = vmul.f32 %v234, %v178
    %v239 = vmul.f32 %v235, %v179
    %v240 = vmul.f32 %v236, %v180
    %v241 = vmul.f32 %v237, %v181
    %v242 = vmul.f32 %v238, 1.442695
    %v243 = vpow.pop %v242
    %v244 = vmul.f32 %v239, 1.442695
    %v245 = vpow.pop %v244
    %v246 = vmul.f32 %v240, 1.442695
    %v247 = vpow.pop %v246
    %v248 = vmul.f32 %v241, 1.442695
    %v249 = vpow.pop %v248
    %v250 = vmul.f32 %v230, %v243
    %v251 = vmul.f32 %v231, %v245
    %v252 = vmul.f32 %v232, %v247
    %v253 = vmul.f32 %v233, %v249
    %v254 = vsub.f32 1.0, %v250
    %v255 = vsub.f32 1.0, %v251
    %v256 = vsub.f32 1.0, %v252
    %v257 = vsub.f32 1.0, %v253
    %vm258 = vcmp.ge.f32.partialorder %v174, 0.0
    %vm259 = vcmp.ge.f32.partialorder %v175, 0.0
    %vm260 = vcmp.ge.f32.partialorder %v176, 0.0
    %vm261 = vcmp.ge.f32.partialorder %v177, 0.0
    %v262 = vsub.f32 0.0, %v254
    %v263 = vsub.f32 0.0, %v255
    %v264 = vsub.f32 0.0, %v256
    %v265 = vsub.f32 0.0, %v257
    %v266 = vsel %vm258, %v254, %v262
    %v267 = vsel %vm259, %v255, %v263
    %v268 = vsel %vm260, %v256, %v264
    %v269 = vsel %vm261, %v257, %v265
    %v270 = vadd.f32 %v266, 1.0
    %v271 = vadd.f32 %v267, 1.0
    %v272 = vadd.f32 %v268, 1.0
    %v273 = vadd.f32 %v269, 1.0
    %v274 = vmul.f32 %v170, %v270
    %v275 = vmul.f32 %v171, %v271
    %v276 = vmul.f32 %v172, %v272
    %v277 = vmul.f32 %v173, %v273
    %v278 = vpack.c.bf16 %v275, %v274
    %v279 = vpack.c.bf16 %v277, %v276
    %v280 = vld [vmem:[%s3] sm:$0xf]
    %v281 = vld [vmem:[%s3 + $0x4] sm:$0xf]
    %v282 = vld [vmem:[%s3 + $0x8] sm:$0xf]
    %v283 = vld [vmem:[%s3 + $0xc] sm:$0xf]
    %v284 = vld [vmem:[%s4] sm:$0x1]
    %v286 = vlaneseq
    %v287 = vshrl.u32 %v286, 7
    %v288 = vsub.s32 0, %v287
    %v289 = vrot.slane %v284, %v288
    %v295 = vunpack.c.l.b16 %v280
    %v296 = vunpack.c.l.b16 %v281
    %v297 = vunpack.c.l.b16 %v282
    %v298 = vunpack.c.l.b16 %v283
    %v299 = vpack.c.b16 %v296, %v295
    %v300 = vpack.c.b16 %v298, %v297
    %vm303 = vcmask 261120
    %v305 = vsel %vm303, %v278, 0
    %v308 = vsel %vm303, %v279, 0
    %310 = vmatprep.subr.bf16.mxu0 0
    %311 = vmatpush1.bf16.msra.mxu0 0
    %312 = vmatprep.subr.bf16.mxu0 0
    %313 = vmatpush1.bf16.msra.mxu0 0
    %314 = vmatprep.subr.bf16.mxu0 0
    %315 = vmatpush1.bf16.msra.mxu0 0
    %316 = vmatprep.subr.bf16.mxu0 0
    %317 = vmatpush1.bf16.msra.mxu0 0
    %318 = vmatprep.subr.bf16.mxu0 0
    %319 = vmatpush1.bf16.msra.mxu0 0
    %320 = vmatprep.subr.bf16.mxu0 0
    %321 = vmatpush1.bf16.msra.mxu0 0
    %322 = vmatprep.subr.bf16.mxu0 0
    %323 = vmatpush1.bf16.msra.mxu0 %v300
    %324 = vmatprep.subr.bf16.mxu0 0
    %325 = vmatpush1.bf16.msra.mxu0 %v299
    %326 = vmatprep.subr.bf16.mxu0 0
    %327 = vmatpush2.bf16.msra.mxu0 0
    %328 = vmatprep.subr.bf16.mxu0 0
    %329 = vmatpush2.bf16.msra.mxu0 0
    %330 = vmatprep.subr.bf16.mxu0 0
    %331 = vmatpush2.bf16.msra.mxu0 0
    %332 = vmatprep.subr.bf16.mxu0 0
    %333 = vmatpush2.bf16.msra.mxu0 0
    %334 = vmatprep.subr.bf16.mxu0 0
    %335 = vmatpush2.bf16.msra.mxu0 0
    %336 = vmatprep.subr.bf16.mxu0 0
    %337 = vmatpush2.bf16.msra.mxu0 0
    %338 = vmatprep.subr.bf16.mxu0 0
    %339 = vmatpush2.bf16.msra.mxu0 0
    %340 = vmatprep.subr.bf16.mxu0 0
    %341 = vmatpush2.bf16.msra.mxu0 0
    %342 = vmatprep.mubr.bf16.mxu0 0
    %343 = vmatmul.mubr.bf16.gmra.mxu0 %v305
    %v344 = vpop.f32.mrf.mxu0
    %v345 = vadd.f32 %v289, %v344
    %v346 = vpop.f32.mrf.mxu0
    %v347 = vpop.f32.mrf.mxu0
    %v348 = vadd.f32 %v289, %v347
    %v349 = vpop.f32.mrf.mxu0
    %350 = vmatprep.mubr.bf16.mxu0 0
    %351 = vmatmul.mubr.bf16.gmra.mxu0 %v308
    %v352 = vpop.f32.mrf.mxu0
    %v353 = vadd.f32 %v289, %v352
    %v354 = vpop.f32.mrf.mxu0
    %v355 = vpop.f32.mrf.mxu0
    %v356 = vadd.f32 %v289, %v355
    %v357 = vpop.f32.mrf.mxu0
    %358 = vdwg.mxu0
    %v359 = vmul.f32 %v345, 0.5
    %v360 = vmul.f32 %v348, 0.5
    %v361 = vmul.f32 %v353, 0.5
    %v362 = vmul.f32 %v356, 0.5
    %v363 = vmul.f32 %v345, 0.70710677
    %v364 = vmul.f32 %v348, 0.70710677
    %v365 = vmul.f32 %v353, 0.70710677
    %v366 = vmul.f32 %v356, 0.70710677
    %v367 = vand.u32 2147483647, %v363
    %v368 = vand.u32 2147483647, %v364
    %v369 = vand.u32 2147483647, %v365
    %v370 = vand.u32 2147483647, %v366
    %v371 = vmul.f32 %v367, 0.3275911
    %v372 = vmul.f32 %v368, 0.3275911
    %v373 = vmul.f32 %v369, 0.3275911
    %v374 = vmul.f32 %v370, 0.3275911
    %v375 = vadd.f32 %v371, 1.0
    %v376 = vadd.f32 %v372, 1.0
    %v377 = vadd.f32 %v373, 1.0
    %v378 = vadd.f32 %v374, 1.0
    %v379 = vrcp.pop %v375
    %v380 = vmul.f32 1.0, %v379
    %v381 = vrcp.pop %v376
    %v382 = vmul.f32 1.0, %v381
    %v383 = vrcp.pop %v377
    %v384 = vmul.f32 1.0, %v383
    %v385 = vrcp.pop %v378
    %v386 = vmul.f32 1.0, %v385
    %v387 = vmul.f32 %v380, 1.0614054
    %v388 = vmul.f32 %v382, 1.0614054
    %v389 = vmul.f32 %v384, 1.0614054
    %v390 = vmul.f32 %v386, 1.0614054
    %v391 = vadd.f32 %v387, -1.4531521
    %v392 = vadd.f32 %v388, -1.4531521
    %v393 = vadd.f32 %v389, -1.4531521
    %v394 = vadd.f32 %v390, -1.4531521
    %v395 = vmul.f32 %v391, %v380
    %v396 = vmul.f32 %v392, %v382
    %v397 = vmul.f32 %v393, %v384
    %v398 = vmul.f32 %v394, %v386
    %v399 = vadd.f32 %v395, 1.4214138
    %v400 = vadd.f32 %v396, 1.4214138
    %v401 = vadd.f32 %v397, 1.4214138
    %v402 = vadd.f32 %v398, 1.4214138
    %v403 = vmul.f32 %v399, %v380
    %v404 = vmul.f32 %v400, %v382
    %v405 = vmul.f32 %v401, %v384
    %v406 = vmul.f32 %v402, %v386
    %v407 = vadd.f32 %v403, -0.28449672
    %v408 = vadd.f32 %v404, -0.28449672
    %v409 = vadd.f32 %v405, -0.28449672
    %v410 = vadd.f32 %v406, -0.28449672
    %v411 = vmul.f32 %v407, %v380
    %v412 = vmul.f32 %v408, %v382
    %v413 = vmul.f32 %v409, %v384
    %v414 = vmul.f32 %v410, %v386
    %v415 = vadd.f32 %v411, 0.2548296
    %v416 = vadd.f32 %v412, 0.2548296
    %v417 = vadd.f32 %v413, 0.2548296
    %v418 = vadd.f32 %v414, 0.2548296
    %v419 = vmul.f32 %v415, %v380
    %v420 = vmul.f32 %v416, %v382
    %v421 = vmul.f32 %v417, %v384
    %v422 = vmul.f32 %v418, %v386
    %v423 = vsub.f32 0.0, %v367
    %v424 = vsub.f32 0.0, %v368
    %v425 = vsub.f32 0.0, %v369
    %v426 = vsub.f32 0.0, %v370
    %v427 = vmul.f32 %v423, %v367
    %v428 = vmul.f32 %v424, %v368
    %v429 = vmul.f32 %v425, %v369
    %v430 = vmul.f32 %v426, %v370
    %v431 = vmul.f32 %v427, 1.442695
    %v432 = vpow.pop %v431
    %v433 = vmul.f32 %v428, 1.442695
    %v434 = vpow.pop %v433
    %v435 = vmul.f32 %v429, 1.442695
    %v436 = vpow.pop %v435
    %v437 = vmul.f32 %v430, 1.442695
    %v438 = vpow.pop %v437
    %v439 = vmul.f32 %v419, %v432
    %v440 = vmul.f32 %v420, %v434
    %v441 = vmul.f32 %v421, %v436
    %v442 = vmul.f32 %v422, %v438
    %v443 = vsub.f32 1.0, %v439
    %v444 = vsub.f32 1.0, %v440
    %v445 = vsub.f32 1.0, %v441
    %v446 = vsub.f32 1.0, %v442
    %vm447 = vcmp.ge.f32.partialorder %v363, 0.0
    %vm448 = vcmp.ge.f32.partialorder %v364, 0.0
    %vm449 = vcmp.ge.f32.partialorder %v365, 0.0
    %vm450 = vcmp.ge.f32.partialorder %v366, 0.0
    %v451 = vsub.f32 0.0, %v443
    %v452 = vsub.f32 0.0, %v444
    %v453 = vsub.f32 0.0, %v445
    %v454 = vsub.f32 0.0, %v446
    %v455 = vsel %vm447, %v443, %v451
    %v456 = vsel %vm448, %v444, %v452
    %v457 = vsel %vm449, %v445, %v453
    %v458 = vsel %vm450, %v446, %v454
    %v459 = vadd.f32 %v455, 1.0
    %v460 = vadd.f32 %v456, 1.0
    %v461 = vadd.f32 %v457, 1.0
    %v462 = vadd.f32 %v458, 1.0
    %v463 = vmul.f32 %v359, %v459
    %v464 = vmul.f32 %v360, %v460
    %v465 = vmul.f32 %v361, %v461
    %v466 = vmul.f32 %v362, %v462
    %v467 = vpack.c.bf16 %v464, %v463
    %v468 = vpack.c.bf16 %v466, %v465
    %v469 = vld [vmem:[%s5] sm:$0xf]
    %v470 = vld [vmem:[%s5 + $0x4] sm:$0xf]
    %v471 = vld [vmem:[%s5 + $0x8] sm:$0xf]
    %v472 = vld [vmem:[%s5 + $0xc] sm:$0xf]
    %v473 = vld [vmem:[%s6] sm:$0x1]
    %v475 = vlaneseq
    %v476 = vshrl.u32 %v475, 7
    %v477 = vsub.s32 0, %v476
    %v478 = vrot.slane %v473, %v477
    %v484 = vunpack.c.l.b16 %v469
    %v485 = vunpack.c.l.b16 %v470
    %v486 = vunpack.c.l.b16 %v471
    %v487 = vunpack.c.l.b16 %v472
    %v488 = vpack.c.b16 %v485, %v484
    %v489 = vpack.c.b16 %v487, %v486
    %v493 = vsel %vm303, %v467, 0
    %v496 = vsel %vm303, %v468, 0
    %498 = vmatprep.subr.bf16.mxu0 0
    %499 = vmatpush1.bf16.msra.mxu0 0
    %500 = vmatprep.subr.bf16.mxu0 0
    %501 = vmatpush1.bf16.msra.mxu0 0
    %502 = vmatprep.subr.bf16.mxu0 0
    %503 = vmatpush1.bf16.msra.mxu0 0
    %504 = vmatprep.subr.bf16.mxu0 0
    %505 = vmatpush1.bf16.msra.mxu0 0
    %506 = vmatprep.subr.bf16.mxu0 0
    %507 = vmatpush1.bf16.msra.mxu0 0
    %508 = vmatprep.subr.bf16.mxu0 0
    %509 = vmatpush1.bf16.msra.mxu0 0
    %510 = vmatprep.subr.bf16.mxu0 0
    %511 = vmatpush1.bf16.msra.mxu0 %v489
    %512 = vmatprep.subr.bf16.mxu0 0
    %513 = vmatpush1.bf16.msra.mxu0 %v488
    %514 = vmatprep.subr.bf16.mxu0 0
    %515 = vmatpush2.bf16.msra.mxu0 0
    %516 = vmatprep.subr.bf16.mxu0 0
    %517 = vmatpush2.bf16.msra.mxu0 0
    %518 = vmatprep.subr.bf16.mxu0 0
    %519 = vmatpush2.bf16.msra.mxu0 0
    %520 = vmatprep.subr.bf16.mxu0 0
    %521 = vmatpush2.bf16.msra.mxu0 0
    %522 = vmatprep.subr.bf16.mxu0 0
    %523 = vmatpush2.bf16.msra.mxu0 0
    %524 = vmatprep.subr.bf16.mxu0 0
    %525 = vmatpush2.bf16.msra.mxu0 0
    %526 = vmatprep.subr.bf16.mxu0 0
    %527 = vmatpush2.bf16.msra.mxu0 0
    %528 = vmatprep.subr.bf16.mxu0 0
    %529 = vmatpush2.bf16.msra.mxu0 0
    %530 = vmatprep.mubr.bf16.mxu0 0
    %531 = vmatmul.mubr.bf16.gmra.mxu0 %v493
    %v532 = vpop.f32.mrf.mxu0
    %v533 = vadd.f32 %v478, %v532
    %v534 = vpop.f32.mrf.mxu0
    %v535 = vpop.f32.mrf.mxu0
    %v536 = vadd.f32 %v478, %v535
    %v537 = vpop.f32.mrf.mxu0
    %538 = vmatprep.mubr.bf16.mxu0 0
    %539 = vmatmul.mubr.bf16.gmra.mxu0 %v496
    %v540 = vpop.f32.mrf.mxu0
    %v541 = vadd.f32 %v478, %v540
    %v542 = vpop.f32.mrf.mxu0
    %v543 = vpop.f32.mrf.mxu0
    %v544 = vadd.f32 %v478, %v543
    %v545 = vpop.f32.mrf.mxu0
    %546 = vdwg.mxu0
    %v547 = vmax.f32 %v533, %v536
    %v548 = vrot.slane %v547, 4
    %v549 = vmax.f32 %v547, %v548
    %v550 = vrot.slane %v549, 2
    %v551 = vmax.f32 %v549, %v550
    %v552 = vrot.slane %v551, 1
    %v553 = vmax.f32 %v551, %v552
    %v554 = vld [vmem:[#allocation2] sm:$0x1]
    %v555 = vmax.f32 %v554, %v553
    %556 = vst [vmem:[#allocation2] sm:$0x1] %v555
    %v557 = vmax.f32 %v541, %v544
    %v558 = vrot.slane %v557, 4
    %v559 = vmax.f32 %v557, %v558
    %v560 = vrot.slane %v559, 2
    %v561 = vmax.f32 %v559, %v560
    %v562 = vrot.slane %v561, 1
    %v563 = vmax.f32 %v561, %v562
    %s564 = scalar_lea.vmem [#allocation2], 1
    %v565 = vld [vmem:[%s564] sm:$0x1]
    %v566 = vmax.f32 %v565, %v563
    %567 = vst [vmem:[%s564] sm:$0x1] %v566
    // Predicated region
    $region34: #{tpu_custom_call.1} parent=1 // pred_check
      _
    $region35: #{tpu_custom_call.1} parent=1 // pred_check_branch
      %569 = sbr.rel (0) target = $region37
    $region36: #{tpu_custom_call.1} parent=1 // pred_region
      %s571 = ssub.s32 32, 32
      %572 = vsyncadd [#allocation3], %s571
      %s573 = sshll.u32 [#allocation2], 4
      %s574 = int_to_ptr.vmem [resolvable:$true] %s573
      %579 = dma.vmem_to_hbm [thread:$0]  %s574, 32, %s7, [#allocation3], 16, 16, 1
    $region37: #{tpu_custom_call.1} parent=1 // pred_fallthru
      _
    // Predicated region
    $region38: #{tpu_custom_call.1} parent=1 // pred_check
      _
    $region39: #{tpu_custom_call.1} parent=1 // pred_check_branch
      %581 = sbr.rel (0) target = $region41
    $region40: #{tpu_custom_call.1} parent=1 // pred_region
      %582 = dma.done [#allocation3], 32
    $region41: #{tpu_custom_call.1} parent=1 // pred_fallthru
      _
    %583 = vsyncpa [#allocation3], 1

</llo_original>
